<compile_context>
chip_gen: v6e
topology: v6e:2x2x1
jax: 0.10.0
libtpu: 0.0.40
codegen_flags: <defaults>
</compile_context>

<pallas_src>
import jax
import jax.numpy as jnp
from jax.experimental import pallas as pl
from jax.experimental.pallas import tpu as pltpu

OUT_DIM = 5
_LANES = 128


def _relu_kernel(w_ref, o_ref):
    # Pure VPU elementwise work on a lane-dense (block_rows, 128) tile.
    # (On v5e bf16 would widen/narrow implicitly anyway; keep it simple.)
    x = w_ref[...]
    o_ref[...] = jnp.maximum(x, jnp.zeros_like(x))


def params_forward(weight: jax.Array, *, max_block_rows: int = 512) -> jax.Array:
    """Equivalent of Params.forward(): relu(weight), any 1-D size."""
    assert weight.ndim == 1
    out_dim = weight.shape[0]
    dtype = weight.dtype

    # Sublane packing: 8 rows/vreg for 4-byte dtypes, 16 for 2-byte, 32 for 1-byte.
    sublane = 8 * (4 // jnp.dtype(dtype).itemsize)

    # Lane-dense layout: rows of 128 lanes, rows rounded up to the sublane pack.
    rows = pl.cdiv(out_dim, _LANES)
    rows = ((rows + sublane - 1) // sublane) * sublane

    # Tile size: as big as useful (up to max_block_rows), multiple of `sublane`.
    block_rows = min(((max_block_rows + sublane - 1) // sublane) * sublane, rows)
    padded_rows = ((rows + block_rows - 1) // block_rows) * block_rows
    padded = padded_rows * _LANES

    # Zero-pad (relu(0) == 0, sliced off below) and present as (rows, 128).
    w2d = jnp.pad(weight, (0, padded - out_dim)).reshape(padded_rows, _LANES)

    grid = (padded_rows // block_rows,)
    out2d = pl.pallas_call(
        _relu_kernel,
        out_shape=jax.ShapeDtypeStruct((padded_rows, _LANES), dtype),
        grid=grid,
        in_specs=[pl.BlockSpec((block_rows, _LANES), lambda i: (i, 0))],
        out_specs=pl.BlockSpec((block_rows, _LANES), lambda i: (i, 0)),
        input_output_aliases={0: 0},  # in-place ReLU on the padded buffer
        compiler_params=pltpu.CompilerParams(
            dimension_semantics=("parallel",),
            vmem_limit_bytes=32 * 1024 * 1024,
        ),
    )(w2d)

    return out2d.reshape(padded)[:out_dim]


if __name__ == "__main__":
    # Deterministic parameter init matching the module's __init__:
    #   weight = [1.0] * out_dim
    weight = jnp.ones((OUT_DIM,), dtype=jnp.float32)

    # Signed example derived from PRNGKey(0) to verify ReLU clamps negatives.
    key = jax.random.PRNGKey(0)
    perturbed = weight + jax.random.normal(key, (OUT_DIM,), dtype=jnp.float32)

    out = params_forward(weight)
    jax.block_until_ready(out)
    out_perturbed = params_forward(perturbed)
    jax.block_until_ready(out_perturbed)

    assert out.shape == (OUT_DIM,)
    assert jnp.allclose(out, jnp.maximum(weight, 0.0)), "mismatch on init weight"
    assert jnp.allclose(out_perturbed, jnp.maximum(perturbed, 0.0)), "mismatch on perturbed"

    # Exercise the gridded lane-dense path with a larger (non-multiple) size.
    big = jax.random.normal(jax.random.PRNGKey(1), (100_000,), dtype=jnp.float32)
    out_big = params_forward(big)
    jax.block_until_ready(out_big)
    assert out_big.shape == big.shape
    assert jnp.allclose(out_big, jnp.maximum(big, 0.0)), "mismatch on large weight"

    print("KERNEL_OK")
</pallas_src>

<mosaic_0001>
module attributes {stable_mosaic.version = 11 : i64} {
  func.func @_relu_kernel(%arg0: i32, %arg1: memref<8x128xf32, #tpu.memory_space<vmem>>, %arg2: memref<8x128xf32, #tpu.memory_space<vmem>>) attributes {dimension_semantics = [#tpu.dimension_semantics<parallel>], iteration_bounds = array<i64: 1>, scalar_prefetch = 0 : i64, scratch_operands = 0 : i64, tpu.core_type = #tpu.core_type<tc>, window_params = [{transform_indices = @transform_0, window_bounds = array<i64: 8, 128>}, {transform_indices = @transform_1, window_bounds = array<i64: 8, 128>}]} {
    %c0 = arith.constant 0 : index
    %c0_0 = arith.constant 0 : index
    %0 = vector.load %arg1[%c0, %c0_0] : memref<8x128xf32, #tpu.memory_space<vmem>>, vector<8x128xf32>
    %cst = arith.constant 0.000000e+00 : f32
    %1 = vector.broadcast %cst : f32 to vector<8x128xf32>
    %2 = arith.maximumf %0, %1 : vector<8x128xf32>
    %c0_1 = arith.constant 0 : index
    %c0_2 = arith.constant 0 : index
    %3 = vector.load %arg2[%c0_1, %c0_2] : memref<8x128xf32, #tpu.memory_space<vmem>>, vector<8x128xf32>
    tpu.vector_store %arg2[%c0_1, %c0_2], %2 {strides = array<i32>} : memref<8x128xf32, #tpu.memory_space<vmem>>, vector<8x128xf32>,
    return
  }
  func.func @transform_0(%arg0: i32) -> (i32, i32) {
    %c0_i32 = arith.constant 0 : i32
    %c0_i32_0 = arith.constant 0 : i32
    return %arg0, %c0_i32 : i32, i32
  }
  func.func @transform_1(%arg0: i32) -> (i32, i32) {
    %c0_i32 = arith.constant 0 : i32
    %c0_i32_0 = arith.constant 0 : i32
    return %arg0, %c0_i32 : i32, i32
  }
}

</mosaic_0001>

<llo_original>
// kernel: tpu_custom_call.1
$region0: #{tpu_custom_call.1}
  #allocation0 [shape = 'u32[]', space=smem, size = 0x4, offset = 0x4, fixed_abs, tag = 'smem constant byte address 0x4 - core index']
  #allocation1 [shape = 'u32[144,128]{1,0:T(1,128)}', space=vmem, size = 0x12000, scoped, tag = 'internal scratch']
  %s0 = inlined_call_operand.hbm [shape: f32[8,128], index: 0, kind: input, shape index: {}, may-alias: {0,1}]
  %s1 = inlined_call_operand.hbm [shape: f32[8,128], index: 1, kind: output, shape index: {}, may-alias: {0,1}]
  %s2 = sld [smem:[#allocation0]]
  $region18: #{tpu_custom_call.1} parent=0
    _
  %s4 = ssub.s32 1, %s2
  %s5 = scalar_select 0, %s4, %s2
  $region1: #{tpu_custom_call.1} parent=0
    #allocation2 [shape = 'u8[4096]{0}', space=vmem, size = 0x1000, scoped, tag = 'input window, operand 0, single buffered']
    #allocation3 [shape = 's32[1]{0}', space=sflag, size = 0x4, scoped, tag = 'scoped memory for tpu_custom_call.1']
    #allocation4 [shape = 's32[1]{0}', space=sflag, size = 0x4, scoped, tag = 'scoped memory for tpu_custom_call.1']
    #allocation5 [shape = 'u8[4096]{0}', space=vmem, size = 0x1000, scoped, tag = 'output window, operand 0, single buffered']
    %6 = vsyncpa [#allocation3], 0
    %7 = vsyncpa [#allocation4], 0
    // Predicated region
    $region2: #{tpu_custom_call.1} parent=1 // pred_check
      _
    $region3: #{tpu_custom_call.1} parent=1 // pred_check_branch
      %9 = sbr.rel (0) target = $region5
    $region4: #{tpu_custom_call.1} parent=1 // pred_region
      %s11 = ssub.s32 128, 128
      %12 = vsyncadd [#allocation3], %s11
      %s14 = sshll.u32 [#allocation2], 4
      %s15 = int_to_ptr.vmem [resolvable:$true] %s14
      %17 = dma.hbm_to_vmem [thread:$0]  %s0, 128, %s15, [#allocation3]
    $region5: #{tpu_custom_call.1} parent=1 // pred_fallthru
      _
    // Predicated region
    $region6: #{tpu_custom_call.1} parent=1 // pred_check
      _
    $region7: #{tpu_custom_call.1} parent=1 // pred_check_branch
      %19 = sbr.rel (0) target = $region9
    $region8: #{tpu_custom_call.1} parent=1 // pred_region
      %20 = dma.done [#allocation3], 128
    $region9: #{tpu_custom_call.1} parent=1 // pred_fallthru
      _
    %v21 = vld [vmem:[#allocation2] sm:$0xff]
    %v22 = vmax.f32 %v21, 0.0
    %23 = vst [vmem:[#allocation5] sm:$0xff] %v22
    // Predicated region
    $region10: #{tpu_custom_call.1} parent=1 // pred_check
      _
    $region11: #{tpu_custom_call.1} parent=1 // pred_check_branch
      %25 = sbr.rel (0) target = $region13
    $region12: #{tpu_custom_call.1} parent=1 // pred_region
      %s27 = ssub.s32 128, 128
      %28 = vsyncadd [#allocation4], %s27
      %s30 = sshll.u32 [#allocation5], 4
      %s31 = int_to_ptr.vmem [resolvable:$true] %s30
      %33 = dma.vmem_to_hbm [thread:$0]  %s31, 128, %s1, [#allocation4]
    $region13: #{tpu_custom_call.1} parent=1 // pred_fallthru
      _
    // Predicated region
    $region14: #{tpu_custom_call.1} parent=1 // pred_check
      _
    $region15: #{tpu_custom_call.1} parent=1 // pred_check_branch
      %35 = sbr.rel (0) target = $region17
    $region16: #{tpu_custom_call.1} parent=1 // pred_region
      %36 = dma.done [#allocation4], 128
    $region17: #{tpu_custom_call.1} parent=1 // pred_fallthru
      _
    %37 = vsyncpa [#allocation3], 1
    %38 = vsyncpa [#allocation4], 1

</llo_original>
